<compile_context>
chip_gen: v7x
topology: tpu7x:2x2x1
jax: 0.10.0
libtpu: 0.0.40
codegen_flags: <defaults>
</compile_context>

<pallas_src>
import jax
import jax.numpy as jnp
from jax.experimental import pallas as pl
from jax.experimental.pallas import tpu as pltpu

_LANE = 128


def _round_up(x, m):
    return ((x + m - 1) // m) * m


def _default_num_cores():
    """TensorCores per chip: 2 on v4 / v5p / v7x (megacore), 1 on v5e / v6e."""
    try:
        kind = jax.devices()[0].device_kind.lower().replace(" ", "")
    except Exception:
        return 1
    if any(t in kind for t in ("v2", "v3", "v5lite", "v5e", "v6lite", "v6e")):
        return 1
    if any(t in kind for t in ("v4", "v5p", "7x", "tpu7")):
        return 2
    return 1


def _make_kernel(fold):
    """fold=2 folds the two lane-halves of each loss tile before the acc RMW."""

    def kernel(q_ref, qm1_ref, preds_ref, target_ref, out_ref, acc_ref):
        s = pl.program_id(1)

        @pl.when(s == 0)
        def _():
            acc_ref[...] = jnp.zeros_like(acc_ref)

        q = q_ref[...]                                  # (Q, 1)   f32, resident
        qm1 = qm1_ref[...]                              # (Q, 1)   f32, resident
        preds = preds_ref[...].astype(jnp.float32)      # (Q, tn)
        target = target_ref[...].astype(jnp.float32)    # (1, tn)  sublane bcast

        errors = target - preds                         # (Q, tn)
        loss = jnp.maximum(q * errors, qm1 * errors)    # (Q, tn), pure VPU

        if fold == 2:
            # Lane slice at a 128-multiple: no cross-lane movement; one
            # accumulator load/store per TWO loss vregs.
            half = loss.shape[1] // 2
            acc_ref[...] += loss[:, :half] + loss[:, half:]
        else:
            acc_ref[...] += loss

        @pl.when(s == pl.num_programs(1) - 1)
        def _():
            # Single cross-lane (XLU) reduce per core, at the very end.
            out_ref[...] = jnp.sum(acc_ref[...], axis=1, keepdims=True)[None]

    return kernel


def quantile_loss(preds, target, quantiles, *, tile_cols=65536, num_cores=None):
    """preds: (N, Q), target: (N,), quantiles: (Q,) or (1, Q).
    Returns the scalar mean pinball loss (matches the PyTorch module)."""
    N, Q = preds.shape
    if num_cores is None:
        num_cores = _default_num_cores()

    # --- column tiling: N lives on the 128-lane axis -------------------------
    n128 = _round_up(N, _LANE)
    n_chunks = n128 // _LANE
    P = num_cores if n_chunks >= num_cores else 1   # split only if >=1 tile/core
    # S before tn => pad only to P * S * tn (no extra-tile blowup).
    S = max(1, pl.cdiv(n128, P * tile_cols))
    tn = _round_up(pl.cdiv(N, P * S), _LANE)
    N_pad = P * S * tn
    fold = 2 if tn % (2 * _LANE) == 0 else 1

    # --- re-layout (Q kept unpadded -> minimal wrapper + kernel HBM traffic) --
    # TODO(synk): if the producer can emit preds already laid out as (Q, N),
    # this transpose/pad pass (the remaining wrapper-side HBM cost) disappears.
    preds_t = jnp.pad(preds.T, ((0, 0), (0, N_pad - N)))            # (Q, N_pad)
    target_row = jnp.pad(target.reshape(1, -1), ((0, 0), (0, N_pad - N)))

    q = jnp.asarray(quantiles, jnp.float32).reshape(-1)             # (Q,)
    q_col = q.reshape(Q, 1)
    qm1_col = (q - 1.0).reshape(Q, 1)

    partials = pl.pallas_call(
        _make_kernel(fold),
        out_shape=jax.ShapeDtypeStruct((P, Q, 1), jnp.float32),
        grid_spec=pltpu.PrefetchScalarGridSpec(
            num_scalar_prefetch=0,
            grid=(P, S),
            in_specs=[
                pl.BlockSpec((Q, 1), lambda p, s: (0, 0)),            # q
                pl.BlockSpec((Q, 1), lambda p, s: (0, 0)),            # q - 1
                pl.BlockSpec((Q, tn), lambda p, s: (0, p * S + s)),   # preds^T
                pl.BlockSpec((1, tn), lambda p, s: (0, p * S + s)),   # target
            ],
            out_specs=pl.BlockSpec((1, Q, 1), lambda p, s: (p, 0, 0)),
            scratch_shapes=[pltpu.VMEM((Q, tn // fold), jnp.float32)],
        ),
        compiler_params=pltpu.CompilerParams(
            dimension_semantics=("parallel", "arbitrary"),
            vmem_limit_bytes=32 * 1024 * 1024,
        ),
    )(q_col, qm1_col, preds_t, target_row)

    return jnp.sum(partials) / jnp.float32(N * Q)


def quantile_loss_ref(preds, target, quantiles):
    q = jnp.asarray(quantiles, jnp.float32).reshape(1, -1)
    errors = target.astype(jnp.float32)[:, None] - preds.astype(jnp.float32)
    return jnp.maximum(q * errors, (q - 1.0) * errors).mean()


if __name__ == "__main__":
    key = jax.random.PRNGKey(0)
    k1, k2, k3, k4, k5, k6 = jax.random.split(key, 6)

    quantiles = jnp.array([0.1, 0.5, 0.9], dtype=jnp.float32)
    Q = 3

    # Small case with defaults: N=16 predictions, Q=3 quantiles (single tile).
    N = 16
    preds = jax.random.normal(k1, (N, Q), dtype=jnp.float32)
    target = jax.random.normal(k2, (N,), dtype=jnp.float32)
    out = jax.block_until_ready(quantile_loss(preds, target, quantiles))
    ref = quantile_loss_ref(preds, target, quantiles)
    assert jnp.allclose(out, ref, atol=1e-5, rtol=1e-5), (out, ref)

    # Ragged case exercising padding, multi-step accumulation and a 2-way
    # "parallel" grid axis (fold disabled since tn == 128).
    N2 = 300
    preds2 = jax.random.normal(k3, (N2, Q), dtype=jnp.float32)
    target2 = jax.random.normal(k4, (N2,), dtype=jnp.float32)
    out2 = jax.block_until_ready(
        quantile_loss(preds2, target2, quantiles, tile_cols=128, num_cores=2))
    ref2 = quantile_loss_ref(preds2, target2, quantiles)
    assert jnp.allclose(out2, ref2, atol=1e-5, rtol=1e-5), (out2, ref2)

    # Case exercising the lane-half fold (tn == 256) and 3 sequential steps.
    N3 = 600
    preds3 = jax.random.normal(k5, (N3, Q), dtype=jnp.float32)
    target3 = jax.random.normal(k6, (N3,), dtype=jnp.float32)
    out3 = jax.block_until_ready(
        quantile_loss(preds3, target3, quantiles, tile_cols=256, num_cores=1))
    ref3 = quantile_loss_ref(preds3, target3, quantiles)
    assert jnp.allclose(out3, ref3, atol=1e-5, rtol=1e-5), (out3, ref3)

    print("KERNEL_OK")
</pallas_src>

<mosaic_0001>
module attributes {stable_mosaic.version = 11 : i64} {
  func.func @kernel(%arg0: i32, %arg1: i32, %arg2: memref<3x1xf32, #tpu.memory_space<vmem>>, %arg3: memref<3x1xf32, #tpu.memory_space<vmem>>, %arg4: memref<3x128xf32, #tpu.memory_space<vmem>>, %arg5: memref<1x128xf32, #tpu.memory_space<vmem>>, %arg6: memref<1x3x1xf32, #tpu.memory_space<vmem>>, %arg7: memref<3x128xf32, #tpu.memory_space<vmem>>) attributes {dimension_semantics = [#tpu.dimension_semantics<parallel>, #tpu.dimension_semantics<arbitrary>], iteration_bounds = array<i64: 1, 1>, scalar_prefetch = 0 : i64, scratch_operands = 1 : i64, tpu.core_type = #tpu.core_type<tc>, window_params = [{pipeline_mode = #tpu.pipeline_mode<synchronous>, transform_indices = @transform_0, window_bounds = array<i64: 3, 1>}, {pipeline_mode = #tpu.pipeline_mode<synchronous>, transform_indices = @transform_1, window_bounds = array<i64: 3, 1>}, {transform_indices = @transform_2, window_bounds = array<i64: 3, 128>}, {transform_indices = @transform_3, window_bounds = array<i64: 1, 128>}, {transform_indices = @transform_4, window_bounds = array<i64: 1, 3, 1>}]} {
    %c0_i32 = arith.constant 0 : i32
    %0 = arith.cmpi eq, %arg1, %c0_i32 : i32
    %1 = arith.extui %0 : i1 to i32
    %c0_i32_0 = arith.constant 0 : i32
    %2 = arith.cmpi ne, %1, %c0_i32_0 : i32
    scf.if %2 {
      %cst = arith.constant 0.000000e+00 : f32
      %20 = vector.broadcast %cst : f32 to vector<3x128xf32>
      %c0_14 = arith.constant 0 : index
      %c0_15 = arith.constant 0 : index
      %21 = vector.load %arg7[%c0_14, %c0_15] : memref<3x128xf32, #tpu.memory_space<vmem>>, vector<3x128xf32>
      tpu.vector_store %arg7[%c0_14, %c0_15], %20 {strides = array<i32>} : memref<3x128xf32, #tpu.memory_space<vmem>>, vector<3x128xf32>,
    } else {
    }
    %c0 = arith.constant 0 : index
    %c0_1 = arith.constant 0 : index
    %3 = vector.load %arg2[%c0, %c0_1] : memref<3x1xf32, #tpu.memory_space<vmem>>, vector<3x1xf32>
    %c0_2 = arith.constant 0 : index
    %c0_3 = arith.constant 0 : index
    %4 = vector.load %arg3[%c0_2, %c0_3] : memref<3x1xf32, #tpu.memory_space<vmem>>, vector<3x1xf32>
    %c0_4 = arith.constant 0 : index
    %c0_5 = arith.constant 0 : index
    %5 = vector.load %arg4[%c0_4, %c0_5] : memref<3x128xf32, #tpu.memory_space<vmem>>, vector<3x128xf32>
    %c0_6 = arith.constant 0 : index
    %c0_7 = arith.constant 0 : index
    %6 = vector.load %arg5[%c0_6, %c0_7] : memref<1x128xf32, #tpu.memory_space<vmem>>, vector<1x128xf32>
    %7 = vector.broadcast %6 : vector<1x128xf32> to vector<3x128xf32>
    %8 = arith.subf %7, %5 : vector<3x128xf32>
    %9 = vector.broadcast %3 : vector<3x1xf32> to vector<3x128xf32>
    %10 = arith.mulf %9, %8 : vector<3x128xf32>
    %11 = vector.broadcast %4 : vector<3x1xf32> to vector<3x128xf32>
    %12 = arith.mulf %11, %8 : vector<3x128xf32>
    %13 = arith.maximumf %10, %12 : vector<3x128xf32>
    %c0_8 = arith.constant 0 : index
    %c0_9 = arith.constant 0 : index
    %14 = vector.load %arg7[%c0_8, %c0_9] : memref<3x128xf32, #tpu.memory_space<vmem>>, vector<3x128xf32>
    %15 = arith.addf %14, %13 : vector<3x128xf32>
    %c0_10 = arith.constant 0 : index
    %c0_11 = arith.constant 0 : index
    %16 = vector.load %arg7[%c0_10, %c0_11] : memref<3x128xf32, #tpu.memory_space<vmem>>, vector<3x128xf32>
    tpu.vector_store %arg7[%c0_10, %c0_11], %15 {strides = array<i32>} : memref<3x128xf32, #tpu.memory_space<vmem>>, vector<3x128xf32>,
    %c0_i32_12 = arith.constant 0 : i32
    %17 = arith.cmpi eq, %arg1, %c0_i32_12 : i32
    %18 = arith.extui %17 : i1 to i32
    %c0_i32_13 = arith.constant 0 : i32
    %19 = arith.cmpi ne, %18, %c0_i32_13 : i32
    scf.if %19 {
      %c0_14 = arith.constant 0 : index
      %c0_15 = arith.constant 0 : index
      %20 = vector.load %arg7[%c0_14, %c0_15] : memref<3x128xf32, #tpu.memory_space<vmem>>, vector<3x128xf32>
      %cst = arith.constant dense<0.000000e+00> : vector<3xf32>
      %21 = vector.multi_reduction <add>, %20, %cst [1] : vector<3x128xf32> to vector<3xf32>
      %22 = vector.shape_cast %21 : vector<3xf32> to vector<3x1xf32>
      %23 = vector.shape_cast %22 : vector<3x1xf32> to vector<1x3x1xf32>
      %c0_16 = arith.constant 0 : index
      %c0_17 = arith.constant 0 : index
      %c0_18 = arith.constant 0 : index
      %24 = vector.load %arg6[%c0_16, %c0_17, %c0_18] : memref<1x3x1xf32, #tpu.memory_space<vmem>>, vector<1x3x1xf32>
      tpu.vector_store %arg6[%c0_16, %c0_17, %c0_18], %23 {strides = array<i32>} : memref<1x3x1xf32, #tpu.memory_space<vmem>>, vector<1x3x1xf32>,
    } else {
    }
    return
  }
  func.func @transform_0(%arg0: i32, %arg1: i32) -> (i32, i32) {
    %c0_i32 = arith.constant 0 : i32
    %c0_i32_0 = arith.constant 0 : i32
    %c0_i32_1 = arith.constant 0 : i32
    return %c0_i32, %c0_i32_0 : i32, i32
  }
  func.func @transform_1(%arg0: i32, %arg1: i32) -> (i32, i32) {
    %c0_i32 = arith.constant 0 : i32
    %c0_i32_0 = arith.constant 0 : i32
    %c0_i32_1 = arith.constant 0 : i32
    return %c0_i32, %c0_i32_0 : i32, i32
  }
  func.func @transform_2(%arg0: i32, %arg1: i32) -> (i32, i32) {
    %c1_i32 = arith.constant 1 : i32
    %0 = arith.muli %arg0, %c1_i32 : i32
    %1 = arith.addi %0, %arg1 : i32
    %c0_i32 = arith.constant 0 : i32
    %c0_i32_0 = arith.constant 0 : i32
    return %c0_i32, %1 : i32, i32
  }
  func.func @transform_3(%arg0: i32, %arg1: i32) -> (i32, i32) {
    %c1_i32 = arith.constant 1 : i32
    %0 = arith.muli %arg0, %c1_i32 : i32
    %1 = arith.addi %0, %arg1 : i32
    %c0_i32 = arith.constant 0 : i32
    %c0_i32_0 = arith.constant 0 : i32
    return %c0_i32, %1 : i32, i32
  }
  func.func @transform_4(%arg0: i32, %arg1: i32) -> (i32, i32, i32) {
    %c0_i32 = arith.constant 0 : i32
    %c0_i32_0 = arith.constant 0 : i32
    %c0_i32_1 = arith.constant 0 : i32
    return %arg0, %c0_i32, %c0_i32_0 : i32, i32, i32
  }
}

</mosaic_0001>

<llo_original>
// kernel: tpu_custom_call.1
$region0: #{tpu_custom_call.1}
  #allocation0 [shape = 'u32[]', space=smem, size = 0x4, offset = 0x4, fixed_abs, tag = 'smem constant byte address 0x4 - core index']
  #allocation1 [shape = 'u32[144,128]{1,0:T(1,128)}', space=vmem, size = 0x12000, scoped, tag = 'internal scratch']
  #allocation2 [shape = 'f32[3,128]{1,0:T(4,128)}', space=vmem, size = 0x800, scoped, tag = 'scratch operand']
  %s0 = inlined_call_operand.vmem [shape: f32[3,1], index: 0, kind: input, shape index: {}]
  %s1 = inlined_call_operand.vmem [shape: f32[3,1], index: 1, kind: input, shape index: {}]
  %s2 = inlined_call_operand.vmem [shape: f32[3,128], index: 2, kind: input, shape index: {}]
  %s3 = inlined_call_operand.vmem [shape: f32[1,128], index: 3, kind: input, shape index: {}]
  %s4 = inlined_call_operand.vmem [shape: f32[1,3,1], index: 4, kind: output, shape index: {}]
  %s5 = sld [smem:[#allocation0]]
  $region34: #{tpu_custom_call.1} parent=0
    _
  %s7 = ssub.s32 1, %s5
  %s8 = scalar_select 0, %s7, %s5
  // Predicated region
  $region2: #{tpu_custom_call.1} parent=0 // pred_check
    _
  $region3: #{tpu_custom_call.1} parent=0 // pred_check_branch
    %10 = sbr.rel (0) target = $region5
  $region4: #{tpu_custom_call.1} parent=0 // pred_region
    _
  $region5: #{tpu_custom_call.1} parent=0 // pred_fallthru
    _
  // Predicated region
  $region6: #{tpu_custom_call.1} parent=0 // pred_check
    _
  $region7: #{tpu_custom_call.1} parent=0 // pred_check_branch
    %12 = sbr.rel (0) target = $region9
  $region8: #{tpu_custom_call.1} parent=0 // pred_region
    _
  $region9: #{tpu_custom_call.1} parent=0 // pred_fallthru
    _
  // Predicated region
  $region10: #{tpu_custom_call.1} parent=0 // pred_check
    _
  $region11: #{tpu_custom_call.1} parent=0 // pred_check_branch
    %14 = sbr.rel (0) target = $region13
  $region12: #{tpu_custom_call.1} parent=0 // pred_region
    %s15 = sadd.s32 0, 0
    %p16 = scmp.lt.s32.totalorder %s15, 0
    %s17 = scalar_select %p16, %s15, 0
    %s18 = smul.addr %s17, 4
    %s19 = scalar_lea.vmem %s2, %s18
    %s20 = sadd.s32 0, 0
  $region13: #{tpu_custom_call.1} parent=0 // pred_fallthru
    _
  // Predicated region
  $region14: #{tpu_custom_call.1} parent=0 // pred_check
    _
  $region15: #{tpu_custom_call.1} parent=0 // pred_check_branch
    %22 = sbr.rel (0) target = $region17
  $region16: #{tpu_custom_call.1} parent=0 // pred_region
    %s23 = sadd.s32 0, 0
    %p24 = scmp.lt.s32.totalorder %s23, 0
    %s25 = scalar_select %p24, %s23, 0
    %s26 = scalar_lea.vmem %s3, %s25
    %s27 = sadd.s32 0, 0
  $region17: #{tpu_custom_call.1} parent=0 // pred_fallthru
    _
  %s28 = sadd.s32 0, 0
  %p29 = scmp.lt.s32.totalorder %s28, 0
  %s30 = scalar_select %p29, %s28, 0
  %s31 = smul.addr %s30, 4
  %s32 = scalar_lea.vmem %s2, %s31
  %s33 = sadd.s32 0, 0
  %p34 = scmp.lt.s32.totalorder %s33, 0
  %s35 = scalar_select %p34, %s33, 0
  %s36 = scalar_lea.vmem %s3, %s35
  %s37 = sadd.s32 0, 0
  %p38 = scmp.lt.s32.totalorder %s37, 0
  %s39 = scalar_select %p38, %s37, 0
  %s40 = smul.addr %s39, 4
  %s41 = scalar_lea.vmem %s2, %s40
  %s42 = sadd.s32 0, 0
  %s43 = sadd.s32 0, 0
  %p44 = scmp.lt.s32.totalorder %s43, 0
  %s45 = scalar_select %p44, %s43, 0
  %s46 = scalar_lea.vmem %s3, %s45
  %s47 = sadd.s32 0, 0
  %p48 = scmp.eq.s32.totalorder 0, 0
  // Predicated region
  $region18: #{tpu_custom_call.1} parent=0 // pred_check
    %p49 = pneg %p48
  $region19: #{tpu_custom_call.1} parent=0 // pred_check_branch
    %51 = sbr.rel (%p49) target = $region21
  $region20: #{tpu_custom_call.1} parent=0 // pred_region
    %52 = vst [vmem:[#allocation2] sm:$0x7] 0.0
  $region21: #{tpu_custom_call.1} parent=0 // pred_fallthru
    _
  %v53 = vld [vmem:[%s0] sm:$0x7]
  %v54 = vld [vmem:[%s1] sm:$0x7]
  %v55 = vld [vmem:[%s41] sm:$0x7]
  %v56 = vld [vmem:[%s46] sm:$0x1]
  %v58 = vlaneseq
  %v59 = vshrl.u32 %v58, 7
  %v60 = vsub.s32 0, %v59
  %v61 = vrot.slane %v56, %v60
  %v63 = vsub.f32 %v61, %v55
  %65 = vset.pattern.permute.xlu0 0
  %66 = vperm.xlu0 %65, %v53
  %v67 = vpop.permute.xlu0 %66
  %v69 = vmul.f32 %v67, %v63
  %71 = vset.pattern.permute.xlu0 0
  %72 = vperm.xlu0 %71, %v54
  %v73 = vpop.permute.xlu0 %72
  %v75 = vmul.f32 %v73, %v63
  %v76 = vmax.f32 %v69, %v75
  %v77 = vld [vmem:[#allocation2] sm:$0x7]
  %v78 = vadd.f32 %v77, %v76
  %79 = vst [vmem:[#allocation2] sm:$0x7] %v78
  // Predicated region
  $region22: #{tpu_custom_call.1} parent=0 // pred_check
    %p80 = pneg %p48
  $region23: #{tpu_custom_call.1} parent=0 // pred_check_branch
    %82 = sbr.rel (%p80) target = $region25
  $region24: #{tpu_custom_call.1} parent=0 // pred_region
    %v83 = vld [vmem:[#allocation2] sm:$0x7]
    %vm84 = vcmask 1042432
    %v85 = vsel %vm84, %v83, 0.0
    %86 = vadd.xlane.f32.xlu0 %v85
    %v87 = vpop.xlane.xlu0 %86
    %vm88 = vcmask 2048
    %89 = vst.msk [vmem:[%s4] sm:$0x7] %vm88, %v87
  $region25: #{tpu_custom_call.1} parent=0 // pred_fallthru
    _
  // Predicated region
  $region26: #{tpu_custom_call.1} parent=0 // pred_check
    _
  $region27: #{tpu_custom_call.1} parent=0 // pred_check_branch
    %91 = sbr.rel (0) target = $region29
  $region28: #{tpu_custom_call.1} parent=0 // pred_region
    _
  $region29: #{tpu_custom_call.1} parent=0 // pred_fallthru
    _
  // Predicated region
  $region30: #{tpu_custom_call.1} parent=0 // pred_check
    _
  $region31: #{tpu_custom_call.1} parent=0 // pred_check_branch
    %93 = sbr.rel (0) target = $region33
  $region32: #{tpu_custom_call.1} parent=0 // pred_region
    _
  $region33: #{tpu_custom_call.1} parent=0 // pred_fallthru
    _

</llo_original>
